<compile_context>
chip_gen: v7x
topology: tpu7x:2x2x1
jax: 0.10.0
libtpu: 0.0.40
codegen_flags: <defaults>
</compile_context>

<pallas_src>
import functools

import jax
import jax.numpy as jnp
from jax import lax
from jax.experimental import pallas as pl
from jax.experimental.pallas import tpu as pltpu


def _round_up(x, m):
    return ((x + m - 1) // m) * m


def _tpu_vmem_capacity_bytes():
    try:
        return int(pltpu.get_tpu_info().vmem_capacity_bytes)
    except Exception:
        return 64 * 1024 * 1024  # conservative fallback (v7x per-core VMEM)


_VMEM_CAP = _tpu_vmem_capacity_bytes()
_BIG_VMEM = _VMEM_CAP >= 100 * 1024 * 1024            # v5e/v6e (128 MiB) vs v7x (64 MiB)
_VMEM_LIMIT = min((_VMEM_CAP * 3) // 4, 112 * 1024 * 1024)
_DEFAULT_TM = 512 if _BIG_VMEM else 256
_DEFAULT_TN = 1024 if _BIG_VMEM else 512


def _fit_tiles(tm, tn, Dp, budget_bytes):
    """Shrink (tm, tn) until the double-buffered f32 working set fits VMEM."""
    def need(a, b):
        # 2x-buffered X, X2, xn, x2n tiles + output tile, all f32.
        return 8 * (a * Dp + b * Dp + a + b + a * b)
    while need(tm, tn) > budget_bytes and (tm > 8 or tn > 128):
        if tn > 128 and (tn >= tm or tm <= 8):
            tn //= 2
        else:
            tm //= 2
    return tm, tn


def _rq_kernel(params_ref, x_ref, xn_ref, x2_ref, x2n_ref, o_ref, *, alpha_mode):
    # params (SMEM, scalar-prefetched): [c, scale, alpha] with
    #   c = -2 / (length_scale^2 * 2*alpha).
    # xn/x2n are already pre-scaled by 1/(length_scale^2 * 2*alpha) in the
    # wrapper, so the pre-pow epilogue is a single mul + adds per element.
    c = params_ref[0]
    scale = params_ref[1]

    # (tm, tn) = X @ X2^T, contraction on the last dims (NT form, no transpose).
    dot = lax.dot_general(
        x_ref[...], x2_ref[...],
        dimension_numbers=(((1,), (1,)), ((), ())),
        preferred_element_type=jnp.float32,
    )

    # base = 1 + K / (2*alpha) with all scalar factors pre-folded.
    t = xn_ref[...] + x2n_ref[...] + c * dot
    # Clamp fp-cancellation negatives (true K >= 0; fold factor is positive).
    base = 1.0 + jnp.maximum(t, 0.0)

    if alpha_mode == "rcp1":          # alpha == 1: base**-1 via EUP vrcp
        r = pl.reciprocal(base, approx=True)
        r = r * (2.0 - base * r)      # one Newton step -> ~f32 accuracy (VPU)
        o_ref[...] = scale * r
    elif alpha_mode == "rcp2":        # alpha == 2: base**-2 via EUP vrcp + square
        r = pl.reciprocal(base, approx=True)
        r = r * (2.0 - base * r)
        o_ref[...] = scale * (r * r)
    else:                             # generic (traced / non-integer) alpha
        alpha = params_ref[2]
        o_ref[...] = scale * jnp.exp(-alpha * jnp.log(base))


@functools.partial(jax.jit, static_argnames=("alpha_mode", "tm_max", "tn_max"))
def _rq_impl(X, X2, length_scale, scale, alpha, *, alpha_mode, tm_max, tn_max):
    # Flatten >2D inputs exactly like the torch module.
    if X.ndim > 2:
        assert X2.ndim > 2, "X and X2 should be same dim"
        X = X.reshape(X.shape[0], -1)
        X2 = X2.reshape(X2.shape[0], -1)
    X = X.astype(jnp.float32)
    X2 = X2.astype(jnp.float32)
    N, D = X.shape
    M, D2 = X2.shape
    assert D == D2

    # --- scalar folding (done once, outside the kernel) ----------------------
    length_scale = jnp.asarray(length_scale, jnp.float32)
    scale = jnp.asarray(scale, jnp.float32)
    alpha = jnp.asarray(alpha, jnp.float32)
    f = 1.0 / (length_scale * length_scale * 2.0 * alpha)   # 1/(ls^2 * 2*alpha)
    c = -2.0 * f
    params = jnp.stack([c, scale, alpha]).astype(jnp.float32)   # (3,) -> SMEM

    # Hoisted norms (computed once in plain JAX), pre-scaled by the fold factor.
    xn = f * jnp.sum(X * X, axis=1, keepdims=True)       # (N, 1)
    x2n = f * jnp.sum(X2 * X2, axis=1)[None, :]           # (1, M), lane-oriented

    # Pad only the contraction dim to a multiple of 128 (zeros are free) so
    # lanes / MXU columns are fully used. N and M are NOT padded: cdiv grid +
    # Pallas edge masking avoid a padded output buffer and trailing slice copy.
    Dp = _round_up(D, 128)
    if Dp != D:
        X = jnp.pad(X, ((0, 0), (0, Dp - D)))
        X2 = jnp.pad(X2, ((0, 0), (0, Dp - D)))

    # --- tile selection -------------------------------------------------------
    tm_max = max(8, (tm_max // 8) * 8)           # row tile: multiple of 8
    tn_max = max(128, (tn_max // 128) * 128)     # col tile: lane-dense multiple of 128
    tm_max, tn_max = _fit_tiles(tm_max, tn_max, Dp, (_VMEM_LIMIT * 4) // 5)
    tm = N if N <= tm_max else tm_max            # exact extent when the array is small
    tn = M if M <= tn_max else tn_max
    grid_m = pl.cdiv(N, tm)
    grid_n = pl.cdiv(M, tn)

    # --- grid ordering: minimize the re-streamed operand's HBM re-reads -------
    # rows outer / cols inner => X resident per outer step, X2 re-read grid_m
    # times (and vice versa). Pick whichever ordering moves fewer HBM bytes.
    rows_outer = (N * Dp + M * Dp * grid_m) <= (M * Dp + N * Dp * grid_n)
    if rows_outer:
        grid = (grid_m, grid_n)
        bi = lambda i, j, p: i       # row-block index
        bj = lambda i, j, p: j       # col-block index
    else:
        grid = (grid_n, grid_m)
        bi = lambda j, i, p: i
        bj = lambda j, i, p: j

    in_specs = [
        pl.BlockSpec((tm, Dp), lambda *a: (bi(*a), 0)),   # X row tile
        pl.BlockSpec((tm, 1), lambda *a: (bi(*a), 0)),    # f*||X||^2 tile
        pl.BlockSpec((tn, Dp), lambda *a: (bj(*a), 0)),   # X2 row tile
        pl.BlockSpec((1, tn), lambda *a: (0, bj(*a))),    # f*||X2||^2 tile
    ]
    out_specs = pl.BlockSpec((tm, tn), lambda *a: (bi(*a), bj(*a)))

    cost = pl.CostEstimate(
        flops=2 * N * M * Dp + 8 * N * M,
        transcendentals=(2 if alpha_mode == "generic" else 1) * N * M,
        bytes_accessed=4 * (N * Dp + M * Dp + N + M + N * M),
    )

    out = pl.pallas_call(
        functools.partial(_rq_kernel, alpha_mode=alpha_mode),
        out_shape=jax.ShapeDtypeStruct((N, M), jnp.float32),
        grid_spec=pltpu.PrefetchScalarGridSpec(
            num_scalar_prefetch=1,
            grid=grid,
            in_specs=in_specs,
            out_specs=out_specs,
        ),
        compiler_params=pltpu.CompilerParams(
            dimension_semantics=("parallel", "parallel"),
            vmem_limit_bytes=_VMEM_LIMIT,
        ),
        cost_estimate=cost,
    )(params, X, xn, X2, x2n)
    return out


def rq_kernel_pallas(X, X2, length_scale, scale, alpha, *, tm_max=None, tn_max=None):
    """RQ kernel forward matching the torch module (exp_restrict='exp' path)."""
    if tm_max is None:
        tm_max = _DEFAULT_TM
    if tn_max is None:
        tn_max = _DEFAULT_TN
    # Static specialization: if alpha is concretely 1.0 or 2.0, base**-alpha is
    # computed with an EUP reciprocal (+ Newton refine) instead of exp/log.
    alpha_mode = "generic"
    try:
        a = float(alpha)           # raises for traced alpha -> generic path
        if a == 1.0:
            alpha_mode = "rcp1"
        elif a == 2.0:
            alpha_mode = "rcp2"
    except Exception:
        pass
    return _rq_impl(X, X2, length_scale, scale, alpha,
                    alpha_mode=alpha_mode, tm_max=int(tm_max), tn_max=int(tn_max))


def rq_kernel_ref(X, X2, length_scale, scale, alpha):
    # Pure-JAX reference matching the torch forward (exp_restrict='exp').
    if X.ndim > 2:
        X = X.reshape(X.shape[0], -1)
        X2 = X2.reshape(X2.shape[0], -1)
    X = X / length_scale
    X2 = X2 / length_scale
    xn = jnp.sum(X * X, axis=1, keepdims=True)
    x2n = jnp.sum(X2 * X2, axis=1, keepdims=True)
    K = -2.0 * X @ X2.T + xn + x2n.T
    return scale * jnp.power(1.0 + K / (2.0 * alpha), -alpha)


if __name__ == "__main__":
    key = jax.random.PRNGKey(0)
    k1, k2, k3, k4, k5, k6 = jax.random.split(key, 6)

    # Non-default params to exercise the scalar folding; alpha=2 -> rcp2 path.
    length_scale = jnp.float32(0.75)
    scale = jnp.float32(1.5)
    alpha = jnp.float32(2.0)

    # Test 1: 4D inputs (flatten path, D=64 padded to 128, single-block grid).
    X = jax.random.normal(k1, (16, 4, 4, 4), dtype=jnp.float32)
    X2 = jax.random.normal(k2, (32, 4, 4, 4), dtype=jnp.float32)
    out = rq_kernel_pallas(X, X2, length_scale, scale, alpha)
    jax.block_until_ready(out)
    ref = rq_kernel_ref(X, X2, length_scale, scale, alpha)
    assert out.shape == (16, 32)
    assert jnp.allclose(out, ref, atol=1e-4, rtol=1e-4), "mismatch vs reference (test 1)"

    # Test 2: 2D inputs with non-divisible N/M (ragged edge-masked blocks,
    # multi-block grid, grid-order swap path), rcp2 alpha specialization.
    Xa = jax.random.normal(k3, (40, 24), dtype=jnp.float32)
    Xb = jax.random.normal(k4, (200, 24), dtype=jnp.float32)
    out2 = rq_kernel_pallas(Xa, Xb, length_scale, scale, alpha, tm_max=16, tn_max=128)
    jax.block_until_ready(out2)
    ref2 = rq_kernel_ref(Xa, Xb, length_scale, scale, alpha)
    assert out2.shape == (40, 200)
    assert jnp.allclose(out2, ref2, atol=1e-4, rtol=1e-4), "mismatch vs reference (test 2)"

    # Test 3: non-integer alpha -> generic exp/log path.
    alpha3 = jnp.float32(1.7)
    Xc = jax.random.normal(k5, (24, 40), dtype=jnp.float32)
    Xd = jax.random.normal(k6, (56, 40), dtype=jnp.float32)
    out3 = rq_kernel_pallas(Xc, Xd, length_scale, scale, alpha3)
    jax.block_until_ready(out3)
    ref3 = rq_kernel_ref(Xc, Xd, length_scale, scale, alpha3)
    assert out3.shape == (24, 56)
    assert jnp.allclose(out3, ref3, atol=1e-4, rtol=1e-4), "mismatch vs reference (test 3)"

    print("KERNEL_OK")
</pallas_src>

<mosaic_0001>
module attributes {stable_mosaic.version = 11 : i64} {
  func.func @_rq_kernel(%arg0: i32, %arg1: i32, %arg2: memref<3xf32, #tpu.memory_space<smem>>, %arg3: memref<16x128xf32, #tpu.memory_space<vmem>>, %arg4: memref<16x1xf32, #tpu.memory_space<vmem>>, %arg5: memref<32x128xf32, #tpu.memory_space<vmem>>, %arg6: memref<1x32xf32, #tpu.memory_space<vmem>>, %arg7: memref<16x32xf32, #tpu.memory_space<vmem>>) attributes {dimension_semantics = [#tpu.dimension_semantics<parallel>, #tpu.dimension_semantics<parallel>], iteration_bounds = array<i64: 1, 1>, scalar_prefetch = 1 : i64, scratch_operands = 0 : i64, tpu.core_type = #tpu.core_type<tc>, window_params = [{transform_indices = @transform_0, window_bounds = array<i64: 16, 128>}, {transform_indices = @transform_1, window_bounds = array<i64: 16, 1>}, {transform_indices = @transform_2, window_bounds = array<i64: 32, 128>}, {transform_indices = @transform_3, window_bounds = array<i64: 1, 32>}, {transform_indices = @transform_4, window_bounds = array<i64: 16, 32>}]} {
    %c0 = arith.constant 0 : index
    %0 = memref.load %arg2[%c0] : memref<3xf32, #tpu.memory_space<smem>>
    %c1 = arith.constant 1 : index
    %1 = memref.load %arg2[%c1] : memref<3xf32, #tpu.memory_space<smem>>
    %c0_0 = arith.constant 0 : index
    %c0_1 = arith.constant 0 : index
    %2 = vector.load %arg3[%c0_0, %c0_1] : memref<16x128xf32, #tpu.memory_space<vmem>>, vector<16x128xf32>
    %c0_2 = arith.constant 0 : index
    %c0_3 = arith.constant 0 : index
    %3 = vector.load %arg5[%c0_2, %c0_3] : memref<32x128xf32, #tpu.memory_space<vmem>>, vector<32x128xf32>
    %cst = arith.constant dense<0.000000e+00> : vector<16x32xf32>
    %4 = tpu.matmul %2, %3, %cst {dimension_numbers = #tpu.dot_dimension_numbers<[1], [1], [0], [0], [0, 0, 1, 0], [], []>} : vector<16x128xf32>, vector<32x128xf32>, vector<16x32xf32> -> vector<16x32xf32>
    %c0_4 = arith.constant 0 : index
    %c0_5 = arith.constant 0 : index
    %5 = vector.load %arg4[%c0_4, %c0_5] : memref<16x1xf32, #tpu.memory_space<vmem>>, vector<16x1xf32>
    %c0_6 = arith.constant 0 : index
    %c0_7 = arith.constant 0 : index
    %6 = vector.load %arg6[%c0_6, %c0_7] : memref<1x32xf32, #tpu.memory_space<vmem>>, vector<1x32xf32>
    %7 = vector.broadcast %5 : vector<16x1xf32> to vector<16x32xf32>
    %8 = vector.broadcast %6 : vector<1x32xf32> to vector<16x32xf32>
    %9 = arith.addf %7, %8 : vector<16x32xf32>
    %10 = vector.broadcast %0 : f32 to vector<16x32xf32>
    %11 = arith.mulf %10, %4 : vector<16x32xf32>
    %12 = arith.addf %9, %11 : vector<16x32xf32>
    %cst_8 = arith.constant 0.000000e+00 : f32
    %13 = vector.broadcast %cst_8 : f32 to vector<16x32xf32>
    %14 = arith.maximumf %12, %13 : vector<16x32xf32>
    %cst_9 = arith.constant 1.000000e+00 : f32
    %15 = vector.broadcast %cst_9 : f32 to vector<16x32xf32>
    %16 = arith.addf %15, %14 : vector<16x32xf32>
    %17 = tpu.reciprocal %16 {approx = true} : vector<16x32xf32> -> vector<16x32xf32>
    %18 = arith.mulf %16, %17 : vector<16x32xf32>
    %cst_10 = arith.constant 2.000000e+00 : f32
    %19 = vector.broadcast %cst_10 : f32 to vector<16x32xf32>
    %20 = arith.subf %19, %18 : vector<16x32xf32>
    %21 = arith.mulf %17, %20 : vector<16x32xf32>
    %22 = arith.mulf %21, %21 : vector<16x32xf32>
    %23 = vector.broadcast %1 : f32 to vector<16x32xf32>
    %24 = arith.mulf %23, %22 : vector<16x32xf32>
    %c0_11 = arith.constant 0 : index
    %c0_12 = arith.constant 0 : index
    %25 = vector.load %arg7[%c0_11, %c0_12] : memref<16x32xf32, #tpu.memory_space<vmem>>, vector<16x32xf32>
    tpu.vector_store %arg7[%c0_11, %c0_12], %24 {strides = array<i32>} : memref<16x32xf32, #tpu.memory_space<vmem>>, vector<16x32xf32>,
    return
  }
  func.func @transform_0(%arg0: i32, %arg1: i32, %arg2: memref<3xf32, #tpu.memory_space<smem>>) -> (i32, i32) {
    %c0_i32 = arith.constant 0 : i32
    %c0_i32_0 = arith.constant 0 : i32
    return %arg0, %c0_i32 : i32, i32
  }
  func.func @transform_1(%arg0: i32, %arg1: i32, %arg2: memref<3xf32, #tpu.memory_space<smem>>) -> (i32, i32) {
    %c0_i32 = arith.constant 0 : i32
    %c0_i32_0 = arith.constant 0 : i32
    return %arg0, %c0_i32 : i32, i32
  }
  func.func @transform_2(%arg0: i32, %arg1: i32, %arg2: memref<3xf32, #tpu.memory_space<smem>>) -> (i32, i32) {
    %c0_i32 = arith.constant 0 : i32
    %c0_i32_0 = arith.constant 0 : i32
    return %arg1, %c0_i32 : i32, i32
  }
  func.func @transform_3(%arg0: i32, %arg1: i32, %arg2: memref<3xf32, #tpu.memory_space<smem>>) -> (i32, i32) {
    %c0_i32 = arith.constant 0 : i32
    %c0_i32_0 = arith.constant 0 : i32
    return %c0_i32, %arg1 : i32, i32
  }
  func.func @transform_4(%arg0: i32, %arg1: i32, %arg2: memref<3xf32, #tpu.memory_space<smem>>) -> (i32, i32) {
    %c0_i32 = arith.constant 0 : i32
    return %arg0, %arg1 : i32, i32
  }
}

</mosaic_0001>

<llo_original>
// kernel: _rq_impl.1
$region0: #{_rq_impl.1}
  #allocation0 [shape = 'u32[]', space=smem, size = 0x4, offset = 0x4, fixed_abs, tag = 'smem constant byte address 0x4 - core index']
  #allocation1 [shape = 'u32[144,128]{1,0:T(1,128)}', space=vmem, size = 0x12000, scoped, tag = 'internal scratch']
  #allocation2 [shape = 's32[1]{0}', space=sflag, size = 0x4, scoped, tag = 'scoped memory for _rq_impl.1']
  #allocation3 [shape = 'u8[512]{0}', space=smem, size = 0x200, scoped, tag = 'prefetched SMEM operand 0']
  %s0 = inlined_call_operand.vmem [shape: f32[3], index: 0, kind: input, shape index: {}]
  %s1 = inlined_call_operand.vmem [shape: f32[16,128], index: 1, kind: input, shape index: {}]
  %s2 = inlined_call_operand.vmem [shape: f32[16,1], index: 2, kind: input, shape index: {}]
  %s3 = inlined_call_operand.vmem [shape: f32[32,128], index: 3, kind: input, shape index: {}]
  %s4 = inlined_call_operand.vmem [shape: f32[1,32], index: 4, kind: input, shape index: {}]
  %s5 = inlined_call_operand.hbm [shape: f32[16,32], index: 5, kind: output, shape index: {}]
  %s6 = sld [smem:[#allocation0]]
  $region26: #{_rq_impl.1} parent=0
    _
  %s8 = ssub.s32 1, %s6
  %s9 = scalar_select 0, %s8, %s6
  %s10 = sshll.u32 %s0, 4
  %s11 = int_to_ptr.vmem [resolvable:$true] %s10
  %13 = dma.vmem_to_smem %s11, 16, [#allocation3], [#allocation2]
  %14 = dma.done [#allocation2], 16
  %15 = sfence
  $region1: #{_rq_impl.1} parent=0
    #allocation4 [shape = 'u8[8192]{0}', space=vmem, size = 0x2000, scoped, tag = 'output window, operand 0, single buffered']
    #allocation5 [shape = 's32[1]{0}', space=sflag, size = 0x4, scoped, tag = 'scoped memory for _rq_impl.1']
    %16 = vsyncpa [#allocation5], 0
    // Predicated region
    $region2: #{_rq_impl.1} parent=1 // pred_check
      _
    $region3: #{_rq_impl.1} parent=1 // pred_check_branch
      %18 = sbr.rel (0) target = $region5
    $region4: #{_rq_impl.1} parent=1 // pred_region
      _
    $region5: #{_rq_impl.1} parent=1 // pred_fallthru
      _
    // Predicated region
    $region6: #{_rq_impl.1} parent=1 // pred_check
      _
    $region7: #{_rq_impl.1} parent=1 // pred_check_branch
      %20 = sbr.rel (0) target = $region9
    $region8: #{_rq_impl.1} parent=1 // pred_region
      _
    $region9: #{_rq_impl.1} parent=1 // pred_fallthru
      _
    // Predicated region
    $region10: #{_rq_impl.1} parent=1 // pred_check
      _
    $region11: #{_rq_impl.1} parent=1 // pred_check_branch
      %22 = sbr.rel (0) target = $region13
    $region12: #{_rq_impl.1} parent=1 // pred_region
      _
    $region13: #{_rq_impl.1} parent=1 // pred_fallthru
      _
    // Predicated region
    $region14: #{_rq_impl.1} parent=1 // pred_check
      _
    $region15: #{_rq_impl.1} parent=1 // pred_check_branch
      %24 = sbr.rel (0) target = $region17
    $region16: #{_rq_impl.1} parent=1 // pred_region
      _
    $region17: #{_rq_impl.1} parent=1 // pred_fallthru
      _
    %s25 = sld [smem:[#allocation3]]
    %s26 = sld [smem:[#allocation3 + $0x1]]
    %v27 = vld [vmem:[%s1] sm:$0xff]
    %v28 = vld [vmem:[%s1 + $0x8] sm:$0xff]
    %v29 = vld [vmem:[%s3] sm:$0xff]
    %v30 = vld [vmem:[%s3 + $0x8] sm:$0xff]
    %v31 = vld [vmem:[%s3 + $0x10] sm:$0xff]
    %v32 = vld [vmem:[%s3 + $0x18] sm:$0xff]
    %33 = vmatprep.subr.mxu0 0.0
    %34 = vmatpush1.xpose.msra.mxu0 %v29
    %35 = vmatprep.subr.mxu0 0.0
    %36 = vmatpush1.xpose.msra.mxu0 %v30
    %37 = vmatprep.subr.mxu0 0.0
    %38 = vmatpush1.xpose.msra.mxu0 %v31
    %39 = vmatprep.subr.mxu0 0.0
    %40 = vmatpush1.xpose.msra.mxu0 %v32
    %41 = vmatprep.subr.mxu0 0.0
    %42 = vmatpush1.xpose.msra.mxu0 0.0
    %43 = vmatprep.subr.mxu0 0.0
    %44 = vmatpush1.xpose.msra.mxu0 0.0
    %45 = vmatprep.subr.mxu0 0.0
    %46 = vmatpush1.xpose.msra.mxu0 0.0
    %47 = vmatprep.subr.mxu0 0.0
    %48 = vmatpush1.xpose.msra.mxu0 0.0
    %49 = vmatprep.subr.mxu0 0.0
    %50 = vmatpush1.xpose.msra.mxu0 0.0
    %51 = vmatprep.subr.mxu0 0.0
    %52 = vmatpush1.xpose.msra.mxu0 0.0
    %53 = vmatprep.subr.mxu0 0.0
    %54 = vmatpush1.xpose.msra.mxu0 0.0
    %55 = vmatprep.subr.mxu0 0.0
    %56 = vmatpush1.xpose.msra.mxu0 0.0
    %57 = vmatprep.subr.mxu0 0.0
    %58 = vmatpush1.xpose.msra.mxu0 0.0
    %59 = vmatprep.subr.mxu0 0.0
    %60 = vmatpush1.xpose.msra.mxu0 0.0
    %61 = vmatprep.subr.mxu0 0.0
    %62 = vmatpush1.xpose.msra.mxu0 0.0
    %63 = vmatprep.subr.mxu0 0.0
    %64 = vmatpush1.xpose.msra.mxu0 0.0
    %65 = vmatprep.subr.mxu0 0.0
    %66 = vmatpush1.xpose.msra.mxu0 0.0
    %67 = vmatprep.subr.mxu0 0.0
    %68 = vmatpush1.xpose.msra.mxu0 0.0
    %69 = vmatprep.subr.mxu0 0.0
    %70 = vmatpush1.xpose.msra.mxu0 0.0
    %71 = vmatprep.subr.mxu0 0.0
    %72 = vmatpush1.xpose.msra.mxu0 0.0
    %73 = vmatprep.subr.mxu0 0.0
    %74 = vmatpush1.xpose.msra.mxu0 0.0
    %75 = vmatprep.subr.mxu0 0.0
    %76 = vmatpush1.xpose.msra.mxu0 0.0
    %77 = vmatprep.subr.mxu0 0.0
    %78 = vmatpush1.xpose.msra.mxu0 0.0
    %79 = vmatprep.subr.mxu0 0.0
    %80 = vmatpush1.xpose.msra.mxu0 0.0
    %81 = vmatprep.subr.mxu0 0.0
    %82 = vmatpush1.xpose.msra.mxu0 0.0
    %83 = vmatprep.subr.mxu0 0.0
    %84 = vmatpush1.xpose.msra.mxu0 0.0
    %85 = vmatprep.subr.mxu0 0.0
    %86 = vmatpush1.xpose.msra.mxu0 0.0
    %87 = vmatprep.subr.mxu0 0.0
    %88 = vmatpush1.xpose.msra.mxu0 0.0
    %89 = vmatprep.subr.mxu0 0.0
    %90 = vmatpush1.xpose.msra.mxu0 0.0
    %91 = vmatprep.subr.mxu0 0.0
    %92 = vmatpush1.xpose.msra.mxu0 0.0
    %93 = vmatprep.subr.mxu0 0.0
    %94 = vmatpush1.xpose.msra.mxu0 0.0
    %95 = vmatprep.subr.mxu0 0.0
    %96 = vmatpush1.xpose.msra.mxu0 0.0
    %97 = vmatprep.mubr.f32.mxu0 0.0
    %98 = vmatmul.mubr.f32.gmra.mrb[0].mxu0 %v27
    %v99 = vpop.f32.mrb[0].mxu0
    %v100 = vadd.f32 0.0, %v99
    %v101 = vpop.f32.mrb[0].mxu0
    %102 = vmatprep.mubr.f32.mxu0 0.0
    %103 = vmatmul.mubr.f32.gmra.mrb[0].mxu0 %v28
    %v104 = vpop.f32.mrb[0].mxu0
    %v105 = vadd.f32 0.0, %v104
    %v106 = vpop.f32.mrb[0].mxu0
    %107 = vdwg.mxu0
    %v108 = vld [vmem:[%s2] sm:$0xff]
    %v109 = vld [vmem:[%s2 + $0x8] sm:$0xff]
    %v110 = vld [vmem:[%s4] sm:$0x1]
    %112 = vset.pattern.permute.xlu0 0
    %113 = vperm.xlu0 %112, %v108
    %v114 = vpop.permute.xlu0 %113
    %117 = vset.pattern.permute.xlu0 0
    %118 = vperm.xlu0 %117, %v109
    %v119 = vpop.permute.xlu0 %118
    %v122 = vlaneseq
    %v123 = vshrl.u32 %v122, 7
    %v124 = vsub.s32 0, %v123
    %v125 = vrot.slane %v110, %v124
    %v127 = vadd.f32 %v114, %v125
    %v128 = vadd.f32 %v119, %v125
    %v129 = vstv %s25
    %v130 = vmul.f32 %v129, %v100
    %v131 = vmul.f32 %v129, %v105
    %v132 = vadd.f32 %v127, %v130
    %v133 = vadd.f32 %v128, %v131
    %v134 = vmax.f32 %v132, 0.0
    %v135 = vmax.f32 %v133, 0.0
    %v136 = vadd.f32 %v134, 1.0
    %v137 = vadd.f32 %v135, 1.0
    %v138 = vrcp.pop %v136
    %v139 = vrcp.pop %v137
    %v140 = vmul.f32 %v136, %v138
    %v141 = vmul.f32 %v137, %v139
    %v142 = vsub.f32 2.0, %v140
    %v143 = vsub.f32 2.0, %v141
    %v144 = vmul.f32 %v138, %v142
    %v145 = vmul.f32 %v139, %v143
    %v146 = vmul.f32 %v144, %v144
    %v147 = vmul.f32 %v145, %v145
    %v148 = vstv %s26
    %v149 = vmul.f32 %v148, %v146
    %v150 = vmul.f32 %v148, %v147
    %vm151 = vcmask 261120
    %152 = vst.msk [vmem:[#allocation4] sm:$0xff] %vm151, %v149
    %153 = vst.msk [vmem:[#allocation4 + $0x8] sm:$0xff] %vm151, %v150
    // Predicated region
    $region18: #{_rq_impl.1} parent=1 // pred_check
      _
    $region19: #{_rq_impl.1} parent=1 // pred_check_branch
      %155 = sbr.rel (0) target = $region21
    $region20: #{_rq_impl.1} parent=1 // pred_region
      %s157 = ssub.s32 256, 256
      %158 = vsyncadd [#allocation5], %s157
      %s159 = sshll.u32 [#allocation4], 4
      %s160 = int_to_ptr.vmem [resolvable:$true] %s159
      %165 = dma.vmem_to_hbm [thread:$0]  %s160, 256, %s5, [#allocation5], 128, 128, 8
    $region21: #{_rq_impl.1} parent=1 // pred_fallthru
      _
    // Predicated region
    $region22: #{_rq_impl.1} parent=1 // pred_check
      _
    $region23: #{_rq_impl.1} parent=1 // pred_check_branch
      %167 = sbr.rel (0) target = $region25
    $region24: #{_rq_impl.1} parent=1 // pred_region
      %168 = dma.done [#allocation5], 256
    $region25: #{_rq_impl.1} parent=1 // pred_fallthru
      _
    %169 = vsyncpa [#allocation5], 1

</llo_original>
